<compile_context>
chip_gen: v5e
topology: v5e:2x2
jax: 0.10.0
libtpu: 0.0.40
codegen_flags: <defaults>
</compile_context>

<pallas_src>
import functools

import jax
import jax.numpy as jnp
from jax.experimental import pallas as pl
from jax.experimental.pallas import tpu as pltpu

_LANE = 128      # lane-axis multiple (last dim)
_SUBLANE = 8     # f32 sublane multiple (second-to-last dim)


def _round_up(x, m):
    return (x + m - 1) // m * m


def _fused_mlp_kernel(*refs, n_layers):
    """refs = (x_ref, w0, b0, w1, b1, ..., o_ref). All feature dims padded to 128."""
    x_ref = refs[0]
    o_ref = refs[-1]
    wb = refs[1:-1]

    y = x_ref[...]                                     # f32 (TB, D0_p)
    for i in range(n_layers):
        w = wb[2 * i][...]                             # bf16 (Din_p, Dout_p), VMEM-resident
        b = wb[2 * i + 1][...]                         # f32  (1, Dout_p)
        y = jnp.dot(y.astype(jnp.bfloat16), w,
                    preferred_element_type=jnp.float32)  # MXU, f32 accumulate
        y = y + b                                      # f32 epilogue
        if i != n_layers - 1:
            y = jnp.maximum(y, 0.0)                    # ReLU (not on last layer)
    o_ref[...] = y.astype(o_ref.dtype)


def init_mlp_params(key, input_dim, output_dim, hidden):
    """Deterministic init matching nn.Linear shapes (uniform +-1/sqrt(fan_in)), f32 masters."""
    dims = [input_dim] + list(hidden) + [output_dim]
    params = []
    for i in range(len(dims) - 1):
        fan_in, fan_out = dims[i], dims[i + 1]
        key, kw, kb = jax.random.split(key, 3)
        bound = 1.0 / jnp.sqrt(jnp.float32(fan_in))
        # stored as [in, out] (transpose of PyTorch's [out, in]); math identical.
        w = jax.random.uniform(kw, (fan_in, fan_out), jnp.float32, -bound, bound)
        b = jax.random.uniform(kb, (fan_out,), jnp.float32, -bound, bound)
        params.append((w, b))
    return params


def mlp_forward(x, params, *, batch_tile=128):
    """Fused MLP forward: ReLU after every layer except the last (matches MLP.forward)."""
    B, Din = x.shape
    n_layers = len(params)
    dims = [Din] + [w.shape[1] for (w, _) in params]
    dims_p = [_round_up(d, _LANE) for d in dims]       # lane-dense padded feature dims

    # --- pad + quantize parameters (zero padding is inert through the whole net) ---
    flat_wb = []
    for i, (w, b) in enumerate(params):
        w_p = jnp.zeros((dims_p[i], dims_p[i + 1]), jnp.bfloat16)
        w_p = w_p.at[: dims[i], : dims[i + 1]].set(w.astype(jnp.bfloat16))
        b_p = jnp.zeros((1, dims_p[i + 1]), jnp.float32)
        b_p = b_p.at[:, : dims[i + 1]].set(b.reshape(1, -1))
        flat_wb += [w_p, b_p]

    # --- pad batch and pick the batch tile ---
    b_pad8 = _round_up(B, _SUBLANE)
    TB = min(batch_tile, b_pad8)
    B_pad = _round_up(B, TB)
    x_p = jnp.zeros((B_pad, dims_p[0]), jnp.float32)
    x_p = x_p.at[:B, :Din].set(x.astype(jnp.float32))

    grid = (B_pad // TB,)

    in_specs = [pl.BlockSpec((TB, dims_p[0]), lambda g: (g, 0))]
    for i in range(n_layers):
        in_specs.append(pl.BlockSpec((dims_p[i], dims_p[i + 1]), lambda g: (0, 0)))  # resident W
        in_specs.append(pl.BlockSpec((1, dims_p[i + 1]), lambda g: (0, 0)))          # resident b
    out_spec = pl.BlockSpec((TB, dims_p[-1]), lambda g: (g, 0))

    flops = sum(2 * B_pad * dims_p[i] * dims_p[i + 1] for i in range(n_layers))
    bytes_accessed = (x_p.size * 4
                      + sum(a.size * a.dtype.itemsize for a in flat_wb)
                      + B_pad * dims_p[-1] * 4)
    cost = pl.CostEstimate(flops=flops, transcendentals=0,
                           bytes_accessed=bytes_accessed)

    kernel = functools.partial(_fused_mlp_kernel, n_layers=n_layers)
    out_p = pl.pallas_call(
        kernel,
        out_shape=jax.ShapeDtypeStruct((B_pad, dims_p[-1]), jnp.float32),
        grid=grid,
        in_specs=in_specs,
        out_specs=out_spec,
        compiler_params=pltpu.CompilerParams(
            dimension_semantics=("parallel",),   # megacore-shardable batch axis
        ),
        cost_estimate=cost,
    )(x_p, *flat_wb)

    return out_p[:B, : dims[-1]]


if __name__ == "__main__":
    # Shapes implied by the original script: x = arange(0, 20, 0.05) -> 400 scalar
    # samples, target sin(x) -> MLP(input=1, output=1, hidden=[32, 32]).
    batch = 400
    input_dim = 1
    output_dim = 1
    hidden = [32, 32]

    key = jax.random.PRNGKey(0)
    key, kx = jax.random.split(key)
    x = jax.random.normal(kx, (batch, input_dim), dtype=jnp.float32)

    params = init_mlp_params(key, input_dim, output_dim, hidden)

    out = mlp_forward(x, params)
    out = jax.block_until_ready(out)

    # Reference in plain JAX, mirroring the kernel's bf16-input / f32-accumulate path.
    ref = x.astype(jnp.float32)
    for i, (w, b) in enumerate(params):
        x_q = ref.astype(jnp.bfloat16).astype(jnp.float32)
        w_q = w.astype(jnp.bfloat16).astype(jnp.float32)
        ref = x_q @ w_q + b
        if i != len(params) - 1:
            ref = jnp.maximum(ref, 0.0)

    assert out.shape == (batch, output_dim)
    assert jnp.allclose(out, ref, atol=2e-3, rtol=2e-3), (
        float(jnp.max(jnp.abs(out - ref))))

    print("KERNEL_OK")
</pallas_src>

<mosaic_0001>
module attributes {stable_mosaic.version = 11 : i64} {
  func.func @_fused_mlp_kernel(%arg0: i32, %arg1: memref<128x128xf32, #tpu.memory_space<vmem>>, %arg2: memref<128x128xbf16, #tpu.memory_space<vmem>>, %arg3: memref<1x128xf32, #tpu.memory_space<vmem>>, %arg4: memref<128x128xbf16, #tpu.memory_space<vmem>>, %arg5: memref<1x128xf32, #tpu.memory_space<vmem>>, %arg6: memref<128x128xbf16, #tpu.memory_space<vmem>>, %arg7: memref<1x128xf32, #tpu.memory_space<vmem>>, %arg8: memref<128x128xf32, #tpu.memory_space<vmem>>) attributes {dimension_semantics = [#tpu.dimension_semantics<parallel>], iteration_bounds = array<i64: 4>, scalar_prefetch = 0 : i64, scratch_operands = 0 : i64, tpu.core_type = #tpu.core_type<tc>, window_params = [{transform_indices = @transform_0, window_bounds = array<i64: 128, 128>}, {pipeline_mode = #tpu.pipeline_mode<synchronous>, transform_indices = @transform_1, window_bounds = array<i64: 128, 128>}, {pipeline_mode = #tpu.pipeline_mode<synchronous>, transform_indices = @transform_2, window_bounds = array<i64: 1, 128>}, {pipeline_mode = #tpu.pipeline_mode<synchronous>, transform_indices = @transform_3, window_bounds = array<i64: 128, 128>}, {pipeline_mode = #tpu.pipeline_mode<synchronous>, transform_indices = @transform_4, window_bounds = array<i64: 1, 128>}, {pipeline_mode = #tpu.pipeline_mode<synchronous>, transform_indices = @transform_5, window_bounds = array<i64: 128, 128>}, {pipeline_mode = #tpu.pipeline_mode<synchronous>, transform_indices = @transform_6, window_bounds = array<i64: 1, 128>}, {transform_indices = @transform_7, window_bounds = array<i64: 128, 128>}]} {
    %c0 = arith.constant 0 : index
    %c0_0 = arith.constant 0 : index
    %0 = vector.load %arg1[%c0, %c0_0] : memref<128x128xf32, #tpu.memory_space<vmem>>, vector<128x128xf32>
    %c0_1 = arith.constant 0 : index
    %c0_2 = arith.constant 0 : index
    %1 = vector.load %arg2[%c0_1, %c0_2] : memref<128x128xbf16, #tpu.memory_space<vmem>>, vector<128x128xbf16>
    %c0_3 = arith.constant 0 : index
    %c0_4 = arith.constant 0 : index
    %2 = vector.load %arg3[%c0_3, %c0_4] : memref<1x128xf32, #tpu.memory_space<vmem>>, vector<1x128xf32>
    %3 = arith.truncf %0 : vector<128x128xf32> to vector<128x128xbf16>
    %cst = arith.constant dense<0.000000e+00> : vector<128x128xf32>
    %4 = tpu.matmul %3, %1, %cst {dimension_numbers = #tpu.dot_dimension_numbers<[1], [0], [0], [1], [0, 0, 1, 1], [], []>} : vector<128x128xbf16>, vector<128x128xbf16>, vector<128x128xf32> -> vector<128x128xf32>
    %5 = vector.broadcast %2 : vector<1x128xf32> to vector<128x128xf32>
    %6 = arith.addf %4, %5 : vector<128x128xf32>
    %cst_5 = arith.constant 0.000000e+00 : f32
    %7 = vector.broadcast %cst_5 : f32 to vector<128x128xf32>
    %8 = arith.maximumf %6, %7 : vector<128x128xf32>
    %c0_6 = arith.constant 0 : index
    %c0_7 = arith.constant 0 : index
    %9 = vector.load %arg4[%c0_6, %c0_7] : memref<128x128xbf16, #tpu.memory_space<vmem>>, vector<128x128xbf16>
    %c0_8 = arith.constant 0 : index
    %c0_9 = arith.constant 0 : index
    %10 = vector.load %arg5[%c0_8, %c0_9] : memref<1x128xf32, #tpu.memory_space<vmem>>, vector<1x128xf32>
    %11 = arith.truncf %8 : vector<128x128xf32> to vector<128x128xbf16>
    %cst_10 = arith.constant dense<0.000000e+00> : vector<128x128xf32>
    %12 = tpu.matmul %11, %9, %cst_10 {dimension_numbers = #tpu.dot_dimension_numbers<[1], [0], [0], [1], [0, 0, 1, 1], [], []>} : vector<128x128xbf16>, vector<128x128xbf16>, vector<128x128xf32> -> vector<128x128xf32>
    %13 = vector.broadcast %10 : vector<1x128xf32> to vector<128x128xf32>
    %14 = arith.addf %12, %13 : vector<128x128xf32>
    %cst_11 = arith.constant 0.000000e+00 : f32
    %15 = vector.broadcast %cst_11 : f32 to vector<128x128xf32>
    %16 = arith.maximumf %14, %15 : vector<128x128xf32>
    %c0_12 = arith.constant 0 : index
    %c0_13 = arith.constant 0 : index
    %17 = vector.load %arg6[%c0_12, %c0_13] : memref<128x128xbf16, #tpu.memory_space<vmem>>, vector<128x128xbf16>
    %c0_14 = arith.constant 0 : index
    %c0_15 = arith.constant 0 : index
    %18 = vector.load %arg7[%c0_14, %c0_15] : memref<1x128xf32, #tpu.memory_space<vmem>>, vector<1x128xf32>
    %19 = arith.truncf %16 : vector<128x128xf32> to vector<128x128xbf16>
    %cst_16 = arith.constant dense<0.000000e+00> : vector<128x128xf32>
    %20 = tpu.matmul %19, %17, %cst_16 {dimension_numbers = #tpu.dot_dimension_numbers<[1], [0], [0], [1], [0, 0, 1, 1], [], []>} : vector<128x128xbf16>, vector<128x128xbf16>, vector<128x128xf32> -> vector<128x128xf32>
    %21 = vector.broadcast %18 : vector<1x128xf32> to vector<128x128xf32>
    %22 = arith.addf %20, %21 : vector<128x128xf32>
    %c0_17 = arith.constant 0 : index
    %c0_18 = arith.constant 0 : index
    %23 = vector.load %arg8[%c0_17, %c0_18] : memref<128x128xf32, #tpu.memory_space<vmem>>, vector<128x128xf32>
    tpu.vector_store %arg8[%c0_17, %c0_18], %22 {strides = array<i32>} : memref<128x128xf32, #tpu.memory_space<vmem>>, vector<128x128xf32>,
    return
  }
  func.func @transform_0(%arg0: i32) -> (i32, i32) {
    %c0_i32 = arith.constant 0 : i32
    %c0_i32_0 = arith.constant 0 : i32
    return %arg0, %c0_i32 : i32, i32
  }
  func.func @transform_1(%arg0: i32) -> (i32, i32) {
    %c0_i32 = arith.constant 0 : i32
    %c0_i32_0 = arith.constant 0 : i32
    %c0_i32_1 = arith.constant 0 : i32
    return %c0_i32, %c0_i32_0 : i32, i32
  }
  func.func @transform_2(%arg0: i32) -> (i32, i32) {
    %c0_i32 = arith.constant 0 : i32
    %c0_i32_0 = arith.constant 0 : i32
    %c0_i32_1 = arith.constant 0 : i32
    return %c0_i32, %c0_i32_0 : i32, i32
  }
  func.func @transform_3(%arg0: i32) -> (i32, i32) {
    %c0_i32 = arith.constant 0 : i32
    %c0_i32_0 = arith.constant 0 : i32
    %c0_i32_1 = arith.constant 0 : i32
    return %c0_i32, %c0_i32_0 : i32, i32
  }
  func.func @transform_4(%arg0: i32) -> (i32, i32) {
    %c0_i32 = arith.constant 0 : i32
    %c0_i32_0 = arith.constant 0 : i32
    %c0_i32_1 = arith.constant 0 : i32
    return %c0_i32, %c0_i32_0 : i32, i32
  }
  func.func @transform_5(%arg0: i32) -> (i32, i32) {
    %c0_i32 = arith.constant 0 : i32
    %c0_i32_0 = arith.constant 0 : i32
    %c0_i32_1 = arith.constant 0 : i32
    return %c0_i32, %c0_i32_0 : i32, i32
  }
  func.func @transform_6(%arg0: i32) -> (i32, i32) {
    %c0_i32 = arith.constant 0 : i32
    %c0_i32_0 = arith.constant 0 : i32
    %c0_i32_1 = arith.constant 0 : i32
    return %c0_i32, %c0_i32_0 : i32, i32
  }
  func.func @transform_7(%arg0: i32) -> (i32, i32) {
    %c0_i32 = arith.constant 0 : i32
    %c0_i32_0 = arith.constant 0 : i32
    return %arg0, %c0_i32 : i32, i32
  }
}

</mosaic_0001>

<llo_original>
// kernel: tpu_custom_call.1
$region0: #{tpu_custom_call.1}
  #allocation0 [shape = 'u32[]', space=smem, size = 0x4, offset = 0x4, fixed_abs, tag = 'smem constant byte address 0x4 - core index']
  #allocation1 [shape = 'u32[72,128]{1,0:T(1,128)}', space=vmem, size = 0x9000, scoped, tag = 'internal scratch']
  %s0 = inlined_call_operand.hbm [shape: f32[512,128], index: 0, kind: input, shape index: {}]
  %s1 = inlined_call_operand.hbm [shape: bf16[128,128], index: 1, kind: input, shape index: {}]
  %s2 = inlined_call_operand.vmem [shape: f32[1,128], index: 2, kind: input, shape index: {}]
  %s3 = inlined_call_operand.hbm [shape: bf16[128,128], index: 3, kind: input, shape index: {}]
  %s4 = inlined_call_operand.vmem [shape: f32[1,128], index: 4, kind: input, shape index: {}]
  %s5 = inlined_call_operand.hbm [shape: bf16[128,128], index: 5, kind: input, shape index: {}]
  %s6 = inlined_call_operand.vmem [shape: f32[1,128], index: 6, kind: input, shape index: {}]
  %s7 = inlined_call_operand.hbm [shape: f32[512,128], index: 7, kind: output, shape index: {}]
  %s8 = sld [smem:[#allocation0]]
  $region77: #{tpu_custom_call.1} parent=0
    _
  %s10 = ssub.s32 1, %s8
  %s11 = scalar_select 0, %s10, %s8
  $region1: #{tpu_custom_call.1} parent=0
    #allocation2 [shape = 'u8[131072]{0}', space=vmem, size = 0x20000, scoped, tag = 'input window, operand 0']
    #allocation3 [shape = 's32[2]{0}', space=sflag, size = 0x8, scoped, tag = 'scoped memory for tpu_custom_call.1']
    #allocation4 [shape = 's32[2]{0}', space=sflag, size = 0x8, scoped, tag = 'scoped memory for tpu_custom_call.1']
    #allocation5 [shape = 'u8[32768]{0}', space=vmem, size = 0x8000, scoped, tag = 'input window, operand 1, single buffered']
    #allocation6 [shape = 's32[1]{0}', space=sflag, size = 0x4, scoped, tag = 'scoped memory for tpu_custom_call.1']
    #allocation7 [shape = 'u8[32768]{0}', space=vmem, size = 0x8000, scoped, tag = 'input window, operand 3, single buffered']
    #allocation8 [shape = 'u8[32768]{0}', space=vmem, size = 0x8000, scoped, tag = 'input window, operand 5, single buffered']
    #allocation9 [shape = 's32[1]{0}', space=sflag, size = 0x4, scoped, tag = 'scoped memory for tpu_custom_call.1']
    #allocation10 [shape = 'u8[131072]{0}', space=vmem, size = 0x20000, scoped, tag = 'output window, operand 0']
    %12 = vsyncpa [#allocation3], 0
    %s13 = scalar_lea.sflag [#allocation3], 1
    %14 = vsyncpa %s13, 0
    %15 = vsyncpa [#allocation6], 0
    %16 = vsyncpa [#allocation9], 0
    %17 = vsyncpa [#allocation4], 0
    %s18 = scalar_lea.sflag [#allocation4], 1
    %19 = vsyncpa %s18, 0
    loop: start=0, step=1, limit=6
    $region2: #{tpu_custom_call.1} parent=1 // loop_pre_header
      _
    $region3: #{tpu_custom_call.1} parent=1 // loop_header
      %s21 = sphi 0, %s25
      %p22 = scmp.ge.s32.totalorder %s21, 6
      %s31 = sphi 0, %s33
      %s34 = sphi 0, %s31
      %s35 = sphi 0, %s34
      %s51 = sphi 0, %s35
      %s55 = sphi 0, %s55
      %s57 = sphi 0, %s55
      %s58 = sphi 0, %s57
      %s72 = sphi 0, %s58
      %s76 = sphi 0, %s76
      %s78 = sphi 0, %s76
      %s79 = sphi 0, %s78
      %s93 = sphi 0, %s79
      %s97 = sphi 0, %s97
      %s99 = sphi 0, %s97
      %s100 = sphi 0, %s99
      %s114 = sphi 0, %s100
      %s118 = sphi 0, %s118
      %s120 = sphi 0, %s118
      %s121 = sphi 0, %s120
      %s135 = sphi 0, %s121
      %s139 = sphi 0, %s139
      %s141 = sphi 0, %s139
      %s142 = sphi 0, %s141
      %s156 = sphi 0, %s142
      %s160 = sphi 0, %s160
      %s162 = sphi 0, %s160
      %s163 = sphi 0, %s162
      %s177 = sphi 0, %s163
      %s183 = sphi 0, %s185
      %s186 = sphi 0, %s183
      %s187 = sphi 0, %s186
      %s203 = sphi 0, %s187
    $region4: #{tpu_custom_call.1} parent=1 // loop_header_branch
      %24 = sbr.rel (%p22) target = $region8
    $region5: #{tpu_custom_call.1} parent=1 // loop_body
      %s26 = ssub.s32 %s21, 1
      %s27 = ssub.s32 %s21, 2
      %s28 = sadd.s32 %s21, 1
      %s29 = ssub.s32 %s21, %s28
      %p30 = scmp.eq.s32.totalorder %s29, 0
      %s32 = sadd.s32 %s31, 1
      %s33 = scalar_select %p30, %s31, %s32
      %p36 = pneg %p30
      %p37 = scmp.eq.s32.totalorder %s21, 3
      %p38 = por %p36, %p37
      %p39 = scmp.ne.s32.totalorder %s31, %s34
      %p40 = scmp.eq.s32.totalorder %s21, 0
      %p41 = por %p39, %p40
      %p42 = scmp.ne.s32.totalorder %s31, %s34
      %p43 = scmp.eq.s32.totalorder %s26, 3
      %p44 = por %p42, %p43
      %p45 = scmp.ne.s32.totalorder %s34, %s35
      %p46 = scmp.eq.s32.totalorder %s26, 0
      %p47 = por %p45, %p46
      %p48 = scmp.ne.s32.totalorder %s34, %s35
      %p49 = scmp.eq.s32.totalorder %s27, 3
      %p50 = por %p48, %p49
      %p52 = scmp.ne.s32.totalorder %s35, %s51
      %p53 = scmp.eq.s32.totalorder %s27, 0
      %p54 = por %p52, %p53
      %s56 = sadd.s32 %s55, 1
      %p59 = scmp.eq.s32.totalorder %s21, 3
      %p60 = scmp.ne.s32.totalorder %s55, %s57
      %p61 = scmp.eq.s32.totalorder %s21, 0
      %p62 = por %p60, %p61
      %p63 = scmp.ne.s32.totalorder %s55, %s57
      %p64 = scmp.eq.s32.totalorder %s26, 3
      %p65 = por %p63, %p64
      %p66 = scmp.ne.s32.totalorder %s57, %s58
      %p67 = scmp.eq.s32.totalorder %s26, 0
      %p68 = por %p66, %p67
      %p69 = scmp.ne.s32.totalorder %s57, %s58
      %p70 = scmp.eq.s32.totalorder %s27, 3
      %p71 = por %p69, %p70
      %p73 = scmp.ne.s32.totalorder %s58, %s72
      %p74 = scmp.eq.s32.totalorder %s27, 0
      %p75 = por %p73, %p74
      %s77 = sadd.s32 %s76, 1
      %p80 = scmp.eq.s32.totalorder %s21, 3
      %p81 = scmp.ne.s32.totalorder %s76, %s78
      %p82 = scmp.eq.s32.totalorder %s21, 0
      %p83 = por %p81, %p82
      %p84 = scmp.ne.s32.totalorder %s76, %s78
      %p85 = scmp.eq.s32.totalorder %s26, 3
      %p86 = por %p84, %p85
      %p87 = scmp.ne.s32.totalorder %s78, %s79
      %p88 = scmp.eq.s32.totalorder %s26, 0
      %p89 = por %p87, %p88
      %p90 = scmp.ne.s32.totalorder %s78, %s79
      %p91 = scmp.eq.s32.totalorder %s27, 3
      %p92 = por %p90, %p91
      %p94 = scmp.ne.s32.totalorder %s79, %s93
      %p95 = scmp.eq.s32.totalorder %s27, 0
      %p96 = por %p94, %p95
      %s98 = sadd.s32 %s97, 1
      %p101 = scmp.eq.s32.totalorder %s21, 3
      %p102 = scmp.ne.s32.totalorder %s97, %s99
      %p103 = scmp.eq.s32.totalorder %s21, 0
      %p104 = por %p102, %p103
      %p105 = scmp.ne.s32.totalorder %s97, %s99
      %p106 = scmp.eq.s32.totalorder %s26, 3
      %p107 = por %p105, %p106
      %p108 = scmp.ne.s32.totalorder %s99, %s100
      %p109 = scmp.eq.s32.totalorder %s26, 0
      %p110 = por %p108, %p109
      %p111 = scmp.ne.s32.totalorder %s99, %s100
      %p112 = scmp.eq.s32.totalorder %s27, 3
      %p113 = por %p111, %p112
      %p115 = scmp.ne.s32.totalorder %s100, %s114
      %p116 = scmp.eq.s32.totalorder %s27, 0
      %p117 = por %p115, %p116
      %s119 = sadd.s32 %s118, 1
      %p122 = scmp.eq.s32.totalorder %s21, 3
      %p123 = scmp.ne.s32.totalorder %s118, %s120
      %p124 = scmp.eq.s32.totalorder %s21, 0
      %p125 = por %p123, %p124
      %p126 = scmp.ne.s32.totalorder %s118, %s120
      %p127 = scmp.eq.s32.totalorder %s26, 3
      %p128 = por %p126, %p127
      %p129 = scmp.ne.s32.totalorder %s120, %s121
      %p130 = scmp.eq.s32.totalorder %s26, 0
      %p131 = por %p129, %p130
      %p132 = scmp.ne.s32.totalorder %s120, %s121
      %p133 = scmp.eq.s32.totalorder %s27, 3
      %p134 = por %p132, %p133
      %p136 = scmp.ne.s32.totalorder %s121, %s135
      %p137 = scmp.eq.s32.totalorder %s27, 0
      %p138 = por %p136, %p137
      %s140 = sadd.s32 %s139, 1
      %p143 = scmp.eq.s32.totalorder %s21, 3
      %p144 = scmp.ne.s32.totalorder %s139, %s141
      %p145 = scmp.eq.s32.totalorder %s21, 0
      %p146 = por %p144, %p145
      %p147 = scmp.ne.s32.totalorder %s139, %s141
      %p148 = scmp.eq.s32.totalorder %s26, 3
      %p149 = por %p147, %p148
      %p150 = scmp.ne.s32.totalorder %s141, %s142
      %p151 = scmp.eq.s32.totalorder %s26, 0
      %p152 = por %p150, %p151
      %p153 = scmp.ne.s32.totalorder %s141, %s142
      %p154 = scmp.eq.s32.totalorder %s27, 3
      %p155 = por %p153, %p154
      %p157 = scmp.ne.s32.totalorder %s142, %s156
      %p158 = scmp.eq.s32.totalorder %s27, 0
      %p159 = por %p157, %p158
      %s161 = sadd.s32 %s160, 1
      %p164 = scmp.eq.s32.totalorder %s21, 3
      %p165 = scmp.ne.s32.totalorder %s160, %s162
      %p166 = scmp.eq.s32.totalorder %s21, 0
      %p167 = por %p165, %p166
      %p168 = scmp.ne.s32.totalorder %s160, %s162
      %p169 = scmp.eq.s32.totalorder %s26, 3
      %p170 = por %p168, %p169
      %p171 = scmp.ne.s32.totalorder %s162, %s163
      %p172 = scmp.eq.s32.totalorder %s26, 0
      %p173 = por %p171, %p172
      %p174 = scmp.ne.s32.totalorder %s162, %s163
      %p175 = scmp.eq.s32.totalorder %s27, 3
      %p176 = por %p174, %p175
      %p178 = scmp.ne.s32.totalorder %s163, %s177
      %p179 = scmp.eq.s32.totalorder %s27, 0
      %p180 = por %p178, %p179
      %s181 = ssub.s32 %s21, %s28
      %p182 = scmp.eq.s32.totalorder %s181, 0
      %s184 = sadd.s32 %s183, 1
      %s185 = scalar_select %p182, %s183, %s184
      %p188 = pneg %p182
      %p189 = scmp.eq.s32.totalorder %s21, 3
      %p190 = por %p188, %p189
      %p191 = scmp.ne.s32.totalorder %s183, %s186
      %p192 = scmp.eq.s32.totalorder %s21, 0
      %p193 = por %p191, %p192
      %p194 = scmp.ne.s32.totalorder %s183, %s186
      %p195 = scmp.eq.s32.totalorder %s26, 3
      %p196 = por %p194, %p195
      %p197 = scmp.ne.s32.totalorder %s186, %s187
      %p198 = scmp.eq.s32.totalorder %s26, 0
      %p199 = por %p197, %p198
      %p200 = scmp.ne.s32.totalorder %s186, %s187
      %p201 = scmp.eq.s32.totalorder %s27, 3
      %p202 = por %p200, %p201
      %p204 = scmp.ne.s32.totalorder %s187, %s203
      %p205 = scmp.eq.s32.totalorder %s27, 0
      %p206 = por %p204, %p205
      %p207 = scmp.le.s32.totalorder 1, %s21
      %p208 = scmp.lt.s32.totalorder %s21, 5
      %p209 = pnand %p207, %p208
      %p210 = pneg %p209
      // Predicated region
      $region9: #{tpu_custom_call.1} parent=5 // pred_check
        _
      $region10: #{tpu_custom_call.1} parent=5 // pred_check_branch
        %212 = sbr.rel (%p209) target = $region12
      $region11: #{tpu_custom_call.1} parent=5 // pred_region
        %s213 = ssub.s32 %s21, 1
        // Predicated region
        $region13: #{tpu_custom_call.1} parent=11 // pred_check
          %p214 = pneg %p68
        $region14: #{tpu_custom_call.1} parent=11 // pred_check_branch
          %216 = sbr.rel (%p214) target = $region16
        $region15: #{tpu_custom_call.1} parent=11 // pred_region
          %218 = vsyncadd [#allocation6], 0
          %s219 = sshll.u32 %s1, 4
          %s220 = int_to_ptr.hbm [resolvable:$true] %s219
          %s221 = sshll.u32 [#allocation5], 4
          %s222 = int_to_ptr.vmem [resolvable:$true] %s221
          %227 = dma.hbm_to_vmem [thread:$0]  %s220, 1024, %s222, [#allocation6], 64, 64, 4
        $region16: #{tpu_custom_call.1} parent=11 // pred_fallthru
          _
        // Predicated region
        $region17: #{tpu_custom_call.1} parent=11 // pred_check
          %p228 = pneg %p89
        $region18: #{tpu_custom_call.1} parent=11 // pred_check_branch
          %230 = sbr.rel (%p228) target = $region20
        $region19: #{tpu_custom_call.1} parent=11 // pred_region
          _
        $region20: #{tpu_custom_call.1} parent=11 // pred_fallthru
          _
        // Predicated region
        $region21: #{tpu_custom_call.1} parent=11 // pred_check
          %p231 = pneg %p110
        $region22: #{tpu_custom_call.1} parent=11 // pred_check_branch
          %233 = sbr.rel (%p231) target = $region24
        $region23: #{tpu_custom_call.1} parent=11 // pred_region
          %235 = vsyncadd [#allocation6], 0
          %s236 = sshll.u32 %s3, 4
          %s237 = int_to_ptr.hbm [resolvable:$true] %s236
          %s238 = sshll.u32 [#allocation7], 4
          %s239 = int_to_ptr.vmem [resolvable:$true] %s238
          %244 = dma.hbm_to_vmem [thread:$0]  %s237, 1024, %s239, [#allocation6], 64, 64, 4
        $region24: #{tpu_custom_call.1} parent=11 // pred_fallthru
          _
        // Predicated region
        $region25: #{tpu_custom_call.1} parent=11 // pred_check
          %p245 = pneg %p131
        $region26: #{tpu_custom_call.1} parent=11 // pred_check_branch
          %247 = sbr.rel (%p245) target = $region28
        $region27: #{tpu_custom_call.1} parent=11 // pred_region
          _
        $region28: #{tpu_custom_call.1} parent=11 // pred_fallthru
          _
        // Predicated region
        $region29: #{tpu_custom_call.1} parent=11 // pred_check
          %p248 = pneg %p152
        $region30: #{tpu_custom_call.1} parent=11 // pred_check_branch
          %250 = sbr.rel (%p248) target = $region32
        $region31: #{tpu_custom_call.1} parent=11 // pred_region
          %252 = vsyncadd [#allocation9], 0
          %s253 = sshll.u32 %s5, 4
          %s254 = int_to_ptr.hbm [resolvable:$true] %s253
          %s255 = sshll.u32 [#allocation8], 4
          %s256 = int_to_ptr.vmem [resolvable:$true] %s255
          %261 = dma.hbm_to_vmem [thread:$0]  %s254, 1024, %s256, [#allocation9], 64, 64, 4
        $region32: #{tpu_custom_call.1} parent=11 // pred_fallthru
          _
        // Predicated region
        $region33: #{tpu_custom_call.1} parent=11 // pred_check
          %p262 = pneg %p173
        $region34: #{tpu_custom_call.1} parent=11 // pred_check_branch
          %264 = sbr.rel (%p262) target = $region36
        $region35: #{tpu_custom_call.1} parent=11 // pred_region
          _
        $region36: #{tpu_custom_call.1} parent=11 // pred_fallthru
          _
      $region12: #{tpu_custom_call.1} parent=5 // pred_fallthru
        _
      %p265 = scmp.lt.s32.totalorder %s21, 4
      // Predicated region
      $region37: #{tpu_custom_call.1} parent=5 // pred_check
        %p266 = pneg %p265
      $region38: #{tpu_custom_call.1} parent=5 // pred_check_branch
        %268 = sbr.rel (%p266) target = $region40
      $region39: #{tpu_custom_call.1} parent=5 // pred_region
        // Predicated region
        $region41: #{tpu_custom_call.1} parent=39 // pred_check
          %p269 = pneg %p41
        $region42: #{tpu_custom_call.1} parent=39 // pred_check_branch
          %271 = sbr.rel (%p269) target = $region44
        $region43: #{tpu_custom_call.1} parent=39 // pred_region
          %s272 = sand.u32 %s31, 1
          %s273 = scalar_lea.sflag [#allocation3], %s272
          %s274 = sand.u32 %s31, 1
          %s275 = smul.addr %s274, 128
          %s276 = scalar_lea.vmem [#allocation2], %s275
          %s277 = smul.u32 16, %s21
          %279 = vsyncadd %s273, 0
          %s280 = smul.addr %s277, 8
          %s281 = scalar_lea.hbm %s0, %s280
          %s282 = sshll.u32 %s281, 4
          %s283 = int_to_ptr.hbm [resolvable:$true] %s282
          %s284 = sshll.u32 %s276, 4
          %s285 = int_to_ptr.vmem [resolvable:$true] %s284
          %290 = dma.hbm_to_vmem [thread:$0]  %s283, 2048, %s285, %s273, 128, 128, 8
        $region44: #{tpu_custom_call.1} parent=39 // pred_fallthru
          _
      $region40: #{tpu_custom_call.1} parent=5 // pred_fallthru
        _
      %p291 = scmp.le.s32.totalorder 1, %s21
      %p292 = scmp.lt.s32.totalorder %s21, 5
      %p293 = pnand %p291, %p292
      %p294 = pneg %p293
      // Predicated region
      $region45: #{tpu_custom_call.1} parent=5 // pred_check
        _
      $region46: #{tpu_custom_call.1} parent=5 // pred_check_branch
        %296 = sbr.rel (%p293) target = $region48
      $region47: #{tpu_custom_call.1} parent=5 // pred_region
        %s297 = ssub.s32 %s21, 1
        %s298 = sand.u32 %s34, 1
        %s299 = scalar_lea.sflag [#allocation3], %s298
        %s300 = sand.u32 %s34, 1
        %s301 = smul.addr %s300, 128
        %s302 = scalar_lea.vmem [#allocation2], %s301
        // Predicated region
        $region49: #{tpu_custom_call.1} parent=47 // pred_check
          %p303 = pneg %p47
        $region50: #{tpu_custom_call.1} parent=47 // pred_check_branch
          %305 = sbr.rel (%p303) target = $region52
        $region51: #{tpu_custom_call.1} parent=47 // pred_region
          %307 = dma.done %s299, 2048
        $region52: #{tpu_custom_call.1} parent=47 // pred_fallthru
          _
        // Predicated region
        $region53: #{tpu_custom_call.1} parent=47 // pred_check
          %p308 = pneg %p68
        $region54: #{tpu_custom_call.1} parent=47 // pred_check_branch
          %310 = sbr.rel (%p308) target = $region56
        $region55: #{tpu_custom_call.1} parent=47 // pred_region
          %312 = dma.done [#allocation6], 1024
        $region56: #{tpu_custom_call.1} parent=47 // pred_fallthru
          _
        // Predicated region
        $region57: #{tpu_custom_call.1} parent=47 // pred_check
          %p313 = pneg %p110
        $region58: #{tpu_custom_call.1} parent=47 // pred_check_branch
          %315 = sbr.rel (%p313) target = $region60
        $region59: #{tpu_custom_call.1} parent=47 // pred_region
          %317 = dma.done [#allocation6], 1024
        $region60: #{tpu_custom_call.1} parent=47 // pred_fallthru
          _
        // Predicated region
        $region61: #{tpu_custom_call.1} parent=47 // pred_check
          %p318 = pneg %p152
        $region62: #{tpu_custom_call.1} parent=47 // pred_check_branch
          %320 = sbr.rel (%p318) target = $region64
        $region63: #{tpu_custom_call.1} parent=47 // pred_region
          %322 = dma.done [#allocation9], 1024
        $region64: #{tpu_custom_call.1} parent=47 // pred_fallthru
          _
        %s323 = sand.u32 %s34, 1
        %s324 = scalar_lea.sflag [#allocation3], %s323
        %s325 = sand.u32 %s34, 1
        %s326 = smul.addr %s325, 128
        %s327 = scalar_lea.vmem [#allocation2], %s326
        %p328 = pneg %p47
        %p329 = pneg %p44
        %p330 = pneg %p68
        %p331 = pneg %p65
        %p332 = pneg %p89
        %p333 = pneg %p86
        %p334 = pneg %p110
        %p335 = pneg %p107
        %p336 = pneg %p131
        %p337 = pneg %p128
        %p338 = pneg %p152
        %p339 = pneg %p149
        %p340 = pneg %p173
        %p341 = pneg %p170
        %p342 = pneg %p199
        %p343 = pneg %p196
        %s344 = sand.u32 %s186, 1
        %s345 = scalar_lea.sflag [#allocation4], %s344
        %s346 = sand.u32 %s186, 1
        %s347 = smul.addr %s346, 128
        %s348 = scalar_lea.vmem [#allocation10], %s347
        %s349 = smul.u32 16, %s26
        %s350 = smul.u32 16, %s26
        %v351 = vld [vmem:[%s302] sm:$0xff]
        %v352 = vld [vmem:[%s302 + $0x8] sm:$0xff]
        %v353 = vld [vmem:[%s302 + $0x10] sm:$0xff]
        %v354 = vld [vmem:[%s302 + $0x18] sm:$0xff]
        %v355 = vld [vmem:[%s302 + $0x20] sm:$0xff]
        %v356 = vld [vmem:[%s302 + $0x28] sm:$0xff]
        %v357 = vld [vmem:[%s302 + $0x30] sm:$0xff]
        %v358 = vld [vmem:[%s302 + $0x38] sm:$0xff]
        %v359 = vld [vmem:[%s302 + $0x40] sm:$0xff]
        %v360 = vld [vmem:[%s302 + $0x48] sm:$0xff]
        %v361 = vld [vmem:[%s302 + $0x50] sm:$0xff]
        %v362 = vld [vmem:[%s302 + $0x58] sm:$0xff]
        %v363 = vld [vmem:[%s302 + $0x60] sm:$0xff]
        %v364 = vld [vmem:[%s302 + $0x68] sm:$0xff]
        %v365 = vld [vmem:[%s302 + $0x70] sm:$0xff]
        %v366 = vld [vmem:[%s302 + $0x78] sm:$0xff]
        %v367 = vld [vmem:[#allocation5] sm:$0xf]
        %v368 = vld [vmem:[#allocation5 + $0x4] sm:$0xf]
        %v369 = vld [vmem:[#allocation5 + $0x8] sm:$0xf]
        %v370 = vld [vmem:[#allocation5 + $0xc] sm:$0xf]
        %v371 = vld [vmem:[#allocation5 + $0x10] sm:$0xf]
        %v372 = vld [vmem:[#allocation5 + $0x14] sm:$0xf]
        %v373 = vld [vmem:[#allocation5 + $0x18] sm:$0xf]
        %v374 = vld [vmem:[#allocation5 + $0x1c] sm:$0xf]
        %v375 = vld [vmem:[#allocation5 + $0x20] sm:$0xf]
        %v376 = vld [vmem:[#allocation5 + $0x24] sm:$0xf]
        %v377 = vld [vmem:[#allocation5 + $0x28] sm:$0xf]
        %v378 = vld [vmem:[#allocation5 + $0x2c] sm:$0xf]
        %v379 = vld [vmem:[#allocation5 + $0x30] sm:$0xf]
        %v380 = vld [vmem:[#allocation5 + $0x34] sm:$0xf]
        %v381 = vld [vmem:[#allocation5 + $0x38] sm:$0xf]
        %v382 = vld [vmem:[#allocation5 + $0x3c] sm:$0xf]
        %v383 = vld [vmem:[%s2] sm:$0x1]
        %v384 = vpack.c.bf16 %v352, %v351
        %v385 = vpack.c.bf16 %v354, %v353
        %v386 = vpack.c.bf16 %v356, %v355
        %v387 = vpack.c.bf16 %v358, %v357
        %v388 = vpack.c.bf16 %v360, %v359
        %v389 = vpack.c.bf16 %v362, %v361
        %v390 = vpack.c.bf16 %v364, %v363
        %v391 = vpack.c.bf16 %v366, %v365
        %v393 = vperm.slane %v383, 0
        %v411 = vunpack.c.l.b16 %v367
        %v412 = vunpack.c.l.b16 %v368
        %v413 = vunpack.c.l.b16 %v369
        %v414 = vunpack.c.l.b16 %v370
        %v415 = vunpack.c.l.b16 %v371
        %v416 = vunpack.c.l.b16 %v372
        %v417 = vunpack.c.l.b16 %v373
        %v418 = vunpack.c.l.b16 %v374
        %v419 = vunpack.c.l.b16 %v375
        %v420 = vunpack.c.l.b16 %v376
        %v421 = vunpack.c.l.b16 %v377
        %v422 = vunpack.c.l.b16 %v378
        %v423 = vunpack.c.l.b16 %v379
        %v424 = vunpack.c.l.b16 %v380
        %v425 = vunpack.c.l.b16 %v381
        %v426 = vunpack.c.l.b16 %v382
        %v427 = vpack.c.b16 %v412, %v411
        %v428 = vpack.c.b16 %v414, %v413
        %v429 = vpack.c.b16 %v416, %v415
        %v430 = vpack.c.b16 %v418, %v417
        %v431 = vpack.c.b16 %v420, %v419
        %v432 = vpack.c.b16 %v422, %v421
        %v433 = vpack.c.b16 %v424, %v423
        %v434 = vpack.c.b16 %v426, %v425
        %443 = vmatpush.bf16.msra.mxu0 %v434
        %444 = vmatpush.bf16.msra.mxu0 %v433
        %445 = vmatpush.bf16.msra.mxu0 %v432
        %446 = vmatpush.bf16.msra.mxu0 %v431
        %447 = vmatpush.bf16.msra.mxu0 %v430
        %448 = vmatpush.bf16.msra.mxu0 %v429
        %449 = vmatpush.bf16.msra.mxu0 %v428
        %450 = vmatpush.bf16.msra.mxu0 %v427
        %451 = vmatmul.bf16.gmra.mxu0 %v384
        %v452 = vpop.f32.mrf.mxu0
        %v453 = vadd.f32 %v393, %v452
        %v454 = vpop.f32.mrf.mxu0
        %v455 = vadd.f32 %v393, %v454
        %456 = vmatmul.bf16.gmra.mxu0 %v385
        %v457 = vpop.f32.mrf.mxu0
        %v458 = vadd.f32 %v393, %v457
        %v459 = vpop.f32.mrf.mxu0
        %v460 = vadd.f32 %v393, %v459
        %461 = vmatmul.bf16.gmra.mxu0 %v386
        %v462 = vpop.f32.mrf.mxu0
        %v463 = vadd.f32 %v393, %v462
        %v464 = vpop.f32.mrf.mxu0
        %v465 = vadd.f32 %v393, %v464
        %466 = vmatmul.bf16.gmra.mxu0 %v387
        %v467 = vpop.f32.mrf.mxu0
        %v468 = vadd.f32 %v393, %v467
        %v469 = vpop.f32.mrf.mxu0
        %v470 = vadd.f32 %v393, %v469
        %471 = vmatmul.bf16.gmra.mxu0 %v388
        %v472 = vpop.f32.mrf.mxu0
        %v473 = vadd.f32 %v393, %v472
        %v474 = vpop.f32.mrf.mxu0
        %v475 = vadd.f32 %v393, %v474
        %476 = vmatmul.bf16.gmra.mxu0 %v389
        %v477 = vpop.f32.mrf.mxu0
        %v478 = vadd.f32 %v393, %v477
        %v479 = vpop.f32.mrf.mxu0
        %v480 = vadd.f32 %v393, %v479
        %481 = vmatmul.bf16.gmra.mxu0 %v390
        %v482 = vpop.f32.mrf.mxu0
        %v483 = vadd.f32 %v393, %v482
        %v484 = vpop.f32.mrf.mxu0
        %v485 = vadd.f32 %v393, %v484
        %486 = vmatmul.bf16.gmra.mxu0 %v391
        %v487 = vpop.f32.mrf.mxu0
        %v488 = vadd.f32 %v393, %v487
        %v489 = vpop.f32.mrf.mxu0
        %v490 = vadd.f32 %v393, %v489
        %491 = vdwg.mxu0
        %v492 = vmax.f32 %v453, 0.0
        %v493 = vmax.f32 %v455, 0.0
        %v494 = vmax.f32 %v458, 0.0
        %v495 = vmax.f32 %v460, 0.0
        %v496 = vmax.f32 %v463, 0.0
        %v497 = vmax.f32 %v465, 0.0
        %v498 = vmax.f32 %v468, 0.0
        %v499 = vmax.f32 %v470, 0.0
        %v500 = vmax.f32 %v473, 0.0
        %v501 = vmax.f32 %v475, 0.0
        %v502 = vmax.f32 %v478, 0.0
        %v503 = vmax.f32 %v480, 0.0
        %v504 = vmax.f32 %v483, 0.0
        %v505 = vmax.f32 %v485, 0.0
        %v506 = vmax.f32 %v488, 0.0
        %v507 = vmax.f32 %v490, 0.0
        %v508 = vld [vmem:[#allocation7] sm:$0xf]
        %v509 = vld [vmem:[#allocation7 + $0x4] sm:$0xf]
        %v510 = vld [vmem:[#allocation7 + $0x8] sm:$0xf]
        %v511 = vld [vmem:[#allocation7 + $0xc] sm:$0xf]
        %v512 = vld [vmem:[#allocation7 + $0x10] sm:$0xf]
        %v513 = vld [vmem:[#allocation7 + $0x14] sm:$0xf]
        %v514 = vld [vmem:[#allocation7 + $0x18] sm:$0xf]
        %v515 = vld [vmem:[#allocation7 + $0x1c] sm:$0xf]
        %v516 = vld [vmem:[#allocation7 + $0x20] sm:$0xf]
        %v517 = vld [vmem:[#allocation7 + $0x24] sm:$0xf]
        %v518 = vld [vmem:[#allocation7 + $0x28] sm:$0xf]
        %v519 = vld [vmem:[#allocation7 + $0x2c] sm:$0xf]
        %v520 = vld [vmem:[#allocation7 + $0x30] sm:$0xf]
        %v521 = vld [vmem:[#allocation7 + $0x34] sm:$0xf]
        %v522 = vld [vmem:[#allocation7 + $0x38] sm:$0xf]
        %v523 = vld [vmem:[#allocation7 + $0x3c] sm:$0xf]
        %v524 = vld [vmem:[%s4] sm:$0x1]
        %v525 = vpack.c.bf16 %v493, %v492
        %v526 = vpack.c.bf16 %v495, %v494
        %v527 = vpack.c.bf16 %v497, %v496
        %v528 = vpack.c.bf16 %v499, %v498
        %v529 = vpack.c.bf16 %v501, %v500
        %v530 = vpack.c.bf16 %v503, %v502
        %v531 = vpack.c.bf16 %v505, %v504
        %v532 = vpack.c.bf16 %v507, %v506
        %v534 = vperm.slane %v524, 0
        %v552 = vunpack.c.l.b16 %v508
        %v553 = vunpack.c.l.b16 %v509
        %v554 = vunpack.c.l.b16 %v510
        %v555 = vunpack.c.l.b16 %v511
        %v556 = vunpack.c.l.b16 %v512
        %v557 = vunpack.c.l.b16 %v513
        %v558 = vunpack.c.l.b16 %v514
        %v559 = vunpack.c.l.b16 %v515
        %v560 = vunpack.c.l.b16 %v516
        %v561 = vunpack.c.l.b16 %v517
        %v562 = vunpack.c.l.b16 %v518
        %v563 = vunpack.c.l.b16 %v519
        %v564 = vunpack.c.l.b16 %v520
        %v565 = vunpack.c.l.b16 %v521
        %v566 = vunpack.c.l.b16 %v522
        %v567 = vunpack.c.l.b16 %v523
        %v568 = vpack.c.b16 %v553, %v552
        %v569 = vpack.c.b16 %v555, %v554
        %v570 = vpack.c.b16 %v557, %v556
        %v571 = vpack.c.b16 %v559, %v558
        %v572 = vpack.c.b16 %v561, %v560
        %v573 = vpack.c.b16 %v563, %v562
        %v574 = vpack.c.b16 %v565, %v564
        %v575 = vpack.c.b16 %v567, %v566
        %584 = vmatpush.bf16.msra.mxu0 %v575
        %585 = vmatpush.bf16.msra.mxu0 %v574
        %586 = vmatpush.bf16.msra.mxu0 %v573
        %587 = vmatpush.bf16.msra.mxu0 %v572
        %588 = vmatpush.bf16.msra.mxu0 %v571
        %589 = vmatpush.bf16.msra.mxu0 %v570
        %590 = vmatpush.bf16.msra.mxu0 %v569
        %591 = vmatpush.bf16.msra.mxu0 %v568
        %592 = vmatmul.bf16.gmra.mxu0 %v525
        %v593 = vpop.f32.mrf.mxu0
        %v594 = vadd.f32 %v534, %v593
        %v595 = vpop.f32.mrf.mxu0
        %v596 = vadd.f32 %v534, %v595
        %597 = vmatmul.bf16.gmra.mxu0 %v526
        %v598 = vpop.f32.mrf.mxu0
        %v599 = vadd.f32 %v534, %v598
        %v600 = vpop.f32.mrf.mxu0
        %v601 = vadd.f32 %v534, %v600
        %602 = vmatmul.bf16.gmra.mxu0 %v527
        %v603 = vpop.f32.mrf.mxu0
        %v604 = vadd.f32 %v534, %v603
        %v605 = vpop.f32.mrf.mxu0
        %v606 = vadd.f32 %v534, %v605
        %607 = vmatmul.bf16.gmra.mxu0 %v528
        %v608 = vpop.f32.mrf.mxu0
        %v609 = vadd.f32 %v534, %v608
        %v610 = vpop.f32.mrf.mxu0
        %v611 = vadd.f32 %v534, %v610
        %612 = vmatmul.bf16.gmra.mxu0 %v529
        %v613 = vpop.f32.mrf.mxu0
        %v614 = vadd.f32 %v534, %v613
        %v615 = vpop.f32.mrf.mxu0
        %v616 = vadd.f32 %v534, %v615
        %617 = vmatmul.bf16.gmra.mxu0 %v530
        %v618 = vpop.f32.mrf.mxu0
        %v619 = vadd.f32 %v534, %v618
        %v620 = vpop.f32.mrf.mxu0
        %v621 = vadd.f32 %v534, %v620
        %622 = vmatmul.bf16.gmra.mxu0 %v531
        %v623 = vpop.f32.mrf.mxu0
        %v624 = vadd.f32 %v534, %v623
        %v625 = vpop.f32.mrf.mxu0
        %v626 = vadd.f32 %v534, %v625
        %627 = vmatmul.bf16.gmra.mxu0 %v532
        %v628 = vpop.f32.mrf.mxu0
        %v629 = vadd.f32 %v534, %v628
        %v630 = vpop.f32.mrf.mxu0
        %v631 = vadd.f32 %v534, %v630
        %632 = vdwg.mxu0
        %v633 = vmax.f32 %v594, 0.0
        %v634 = vmax.f32 %v596, 0.0
        %v635 = vmax.f32 %v599, 0.0
        %v636 = vmax.f32 %v601, 0.0
        %v637 = vmax.f32 %v604, 0.0
        %v638 = vmax.f32 %v606, 0.0
        %v639 = vmax.f32 %v609, 0.0
        %v640 = vmax.f32 %v611, 0.0
        %v641 = vmax.f32 %v614, 0.0
        %v642 = vmax.f32 %v616, 0.0
        %v643 = vmax.f32 %v619, 0.0
        %v644 = vmax.f32 %v621, 0.0
        %v645 = vmax.f32 %v624, 0.0
        %v646 = vmax.f32 %v626, 0.0
        %v647 = vmax.f32 %v629, 0.0
        %v648 = vmax.f32 %v631, 0.0
        %v649 = vld [vmem:[#allocation8] sm:$0xf]
        %v650 = vld [vmem:[#allocation8 + $0x4] sm:$0xf]
        %v651 = vld [vmem:[#allocation8 + $0x8] sm:$0xf]
        %v652 = vld [vmem:[#allocation8 + $0xc] sm:$0xf]
        %v653 = vld [vmem:[#allocation8 + $0x10] sm:$0xf]
        %v654 = vld [vmem:[#allocation8 + $0x14] sm:$0xf]
        %v655 = vld [vmem:[#allocation8 + $0x18] sm:$0xf]
        %v656 = vld [vmem:[#allocation8 + $0x1c] sm:$0xf]
        %v657 = vld [vmem:[#allocation8 + $0x20] sm:$0xf]
        %v658 = vld [vmem:[#allocation8 + $0x24] sm:$0xf]
        %v659 = vld [vmem:[#allocation8 + $0x28] sm:$0xf]
        %v660 = vld [vmem:[#allocation8 + $0x2c] sm:$0xf]
        %v661 = vld [vmem:[#allocation8 + $0x30] sm:$0xf]
        %v662 = vld [vmem:[#allocation8 + $0x34] sm:$0xf]
        %v663 = vld [vmem:[#allocation8 + $0x38] sm:$0xf]
        %v664 = vld [vmem:[#allocation8 + $0x3c] sm:$0xf]
        %v665 = vld [vmem:[%s6] sm:$0x1]
        %v666 = vpack.c.bf16 %v634, %v633
        %v667 = vpack.c.bf16 %v636, %v635
        %v668 = vpack.c.bf16 %v638, %v637
        %v669 = vpack.c.bf16 %v640, %v639
        %v670 = vpack.c.bf16 %v642, %v641
        %v671 = vpack.c.bf16 %v644, %v643
        %v672 = vpack.c.bf16 %v646, %v645
        %v673 = vpack.c.bf16 %v648, %v647
        %v675 = vperm.slane %v665, 0
        %v693 = vunpack.c.l.b16 %v649
        %v694 = vunpack.c.l.b16 %v650
        %v695 = vunpack.c.l.b16 %v651
        %v696 = vunpack.c.l.b16 %v652
        %v697 = vunpack.c.l.b16 %v653
        %v698 = vunpack.c.l.b16 %v654
        %v699 = vunpack.c.l.b16 %v655
        %v700 = vunpack.c.l.b16 %v656
        %v701 = vunpack.c.l.b16 %v657
        %v702 = vunpack.c.l.b16 %v658
        %v703 = vunpack.c.l.b16 %v659
        %v704 = vunpack.c.l.b16 %v660
        %v705 = vunpack.c.l.b16 %v661
        %v706 = vunpack.c.l.b16 %v662
        %v707 = vunpack.c.l.b16 %v663
        %v708 = vunpack.c.l.b16 %v664
        %v709 = vpack.c.b16 %v694, %v693
        %v710 = vpack.c.b16 %v696, %v695
        %v711 = vpack.c.b16 %v698, %v697
        %v712 = vpack.c.b16 %v700, %v699
        %v713 = vpack.c.b16 %v702, %v701
        %v714 = vpack.c.b16 %v704, %v703
        %v715 = vpack.c.b16 %v706, %v705
        %v716 = vpack.c.b16 %v708, %v707
        %725 = vmatpush.bf16.msra.mxu0 %v716
        %726 = vmatpush.bf16.msra.mxu0 %v715
        %727 = vmatpush.bf16.msra.mxu0 %v714
        %728 = vmatpush.bf16.msra.mxu0 %v713
        %729 = vmatpush.bf16.msra.mxu0 %v712
        %730 = vmatpush.bf16.msra.mxu0 %v711
        %731 = vmatpush.bf16.msra.mxu0 %v710
        %732 = vmatpush.bf16.msra.mxu0 %v709
        %733 = vmatmul.bf16.gmra.mxu0 %v666
        %v734 = vpop.f32.mrf.mxu0
        %v735 = vadd.f32 %v675, %v734
        %v736 = vpop.f32.mrf.mxu0
        %v737 = vadd.f32 %v675, %v736
        %738 = vmatmul.bf16.gmra.mxu0 %v667
        %v739 = vpop.f32.mrf.mxu0
        %v740 = vadd.f32 %v675, %v739
        %v741 = vpop.f32.mrf.mxu0
        %v742 = vadd.f32 %v675, %v741
        %743 = vmatmul.bf16.gmra.mxu0 %v668
        %v744 = vpop.f32.mrf.mxu0
        %v745 = vadd.f32 %v675, %v744
        %v746 = vpop.f32.mrf.mxu0
        %v747 = vadd.f32 %v675, %v746
        %748 = vmatmul.bf16.gmra.mxu0 %v669
        %v749 = vpop.f32.mrf.mxu0
        %v750 = vadd.f32 %v675, %v749
        %v751 = vpop.f32.mrf.mxu0
        %v752 = vadd.f32 %v675, %v751
        %753 = vmatmul.bf16.gmra.mxu0 %v670
        %v754 = vpop.f32.mrf.mxu0
        %v755 = vadd.f32 %v675, %v754
        %v756 = vpop.f32.mrf.mxu0
        %v757 = vadd.f32 %v675, %v756
        %758 = vmatmul.bf16.gmra.mxu0 %v671
        %v759 = vpop.f32.mrf.mxu0
        %v760 = vadd.f32 %v675, %v759
        %v761 = vpop.f32.mrf.mxu0
        %v762 = vadd.f32 %v675, %v761
        %763 = vmatmul.bf16.gmra.mxu0 %v672
        %v764 = vpop.f32.mrf.mxu0
        %v765 = vadd.f32 %v675, %v764
        %v766 = vpop.f32.mrf.mxu0
        %v767 = vadd.f32 %v675, %v766
        %768 = vmatmul.bf16.gmra.mxu0 %v673
        %v769 = vpop.f32.mrf.mxu0
        %v770 = vadd.f32 %v675, %v769
        %v771 = vpop.f32.mrf.mxu0
        %v772 = vadd.f32 %v675, %v771
        %773 = vdwg.mxu0
        %774 = vst [vmem:[%s348] sm:$0xff] %v735
        %775 = vst [vmem:[%s348 + $0x8] sm:$0xff] %v737
        %776 = vst [vmem:[%s348 + $0x10] sm:$0xff] %v740
        %777 = vst [vmem:[%s348 + $0x18] sm:$0xff] %v742
        %778 = vst [vmem:[%s348 + $0x20] sm:$0xff] %v745
        %779 = vst [vmem:[%s348 + $0x28] sm:$0xff] %v747
        %780 = vst [vmem:[%s348 + $0x30] sm:$0xff] %v750
        %781 = vst [vmem:[%s348 + $0x38] sm:$0xff] %v752
        %782 = vst [vmem:[%s348 + $0x40] sm:$0xff] %v755
        %783 = vst [vmem:[%s348 + $0x48] sm:$0xff] %v757
        %784 = vst [vmem:[%s348 + $0x50] sm:$0xff] %v760
        %785 = vst [vmem:[%s348 + $0x58] sm:$0xff] %v762
        %786 = vst [vmem:[%s348 + $0x60] sm:$0xff] %v765
        %787 = vst [vmem:[%s348 + $0x68] sm:$0xff] %v767
        %788 = vst [vmem:[%s348 + $0x70] sm:$0xff] %v770
        %789 = vst [vmem:[%s348 + $0x78] sm:$0xff] %v772
        %s790 = sand.u32 %s186, 1
        %s791 = scalar_lea.sflag [#allocation4], %s790
        %s792 = sand.u32 %s186, 1
        %s793 = smul.addr %s792, 128
        %s794 = scalar_lea.vmem [#allocation10], %s793
        // Predicated region
        $region65: #{tpu_custom_call.1} parent=47 // pred_check
          %p795 = pneg %p196
        $region66: #{tpu_custom_call.1} parent=47 // pred_check_branch
          %797 = sbr.rel (%p795) target = $region68
        $region67: #{tpu_custom_call.1} parent=47 // pred_region
          %s798 = smul.u32 16, %s26
          %800 = vsyncadd %s791, 0
          %s801 = smul.addr %s798, 8
          %s802 = scalar_lea.hbm %s7, %s801
          %s803 = sshll.u32 %s794, 4
          %s804 = int_to_ptr.vmem [resolvable:$true] %s803
          %s805 = sshll.u32 %s802, 4
          %s806 = int_to_ptr.hbm [resolvable:$true] %s805
          %811 = dma.vmem_to_hbm [thread:$0]  %s804, 2048, %s806, %s791, 128, 128, 8
        $region68: #{tpu_custom_call.1} parent=47 // pred_fallthru
          _
      $region48: #{tpu_custom_call.1} parent=5 // pred_fallthru
        _
      %p812 = scmp.le.s32.totalorder 2, %s21
      // Predicated region
      $region69: #{tpu_custom_call.1} parent=5 // pred_check
        %p813 = pneg %p812
      $region70: #{tpu_custom_call.1} parent=5 // pred_check_branch
        %815 = sbr.rel (%p813) target = $region72
      $region71: #{tpu_custom_call.1} parent=5 // pred_region
        %s816 = ssub.s32 %s21, 2
        // Predicated region
        $region73: #{tpu_custom_call.1} parent=71 // pred_check
          %p817 = pneg %p202
        $region74: #{tpu_custom_call.1} parent=71 // pred_check_branch
          %819 = sbr.rel (%p817) target = $region76
        $region75: #{tpu_custom_call.1} parent=71 // pred_region
          %s820 = sand.u32 %s187, 1
          %s821 = scalar_lea.sflag [#allocation4], %s820
          %s822 = sand.u32 %s187, 1
          %s823 = smul.addr %s822, 128
          %s824 = scalar_lea.vmem [#allocation10], %s823
          %826 = dma.done %s821, 2048
        $region76: #{tpu_custom_call.1} parent=71 // pred_fallthru
          _
      $region72: #{tpu_custom_call.1} parent=5 // pred_fallthru
        _
    $region6: #{tpu_custom_call.1} parent=1 // loop_footer
      %s25 = sadd.s32 1, %s21
    $region7: #{tpu_custom_call.1} parent=1 // loop_footer_branch
      %20 = sbr.rel target = $region3
    $region8: #{tpu_custom_call.1} parent=1 // loop_exit
      _
    %827 = vsyncpa [#allocation3], 1
    %s828 = scalar_lea.sflag [#allocation3], 1
    %829 = vsyncpa %s828, 1
    %830 = vsyncpa [#allocation6], 1
    %831 = vsyncpa [#allocation9], 1
    %832 = vsyncpa [#allocation4], 1
    %s833 = scalar_lea.sflag [#allocation4], 1
    %834 = vsyncpa %s833, 1

</llo_original>
